<compile_context>
chip_gen: v6e
topology: v6e:2x2x1
jax: 0.10.0
libtpu: 0.0.40
codegen_flags: <defaults>
</compile_context>

<pallas_src>
import functools

import jax
import jax.numpy as jnp
from jax import lax
from jax.experimental import pallas as pl
from jax.experimental.pallas import tpu as pltpu

MXU_DTYPE = jnp.bfloat16   # MXU operand dtype (f32 accumulation).


def _round_up(x, m):
    return (x + m - 1) // m * m


def decoder_rnn_kernel(T, U,
                       x_ref, wih0_ref, whh0_ref, b0_ref,
                       wih1_ref, whh1_ref, b1_ref, wfc_ref, bfc_ref,
                       h_init_ref, c_init_ref,
                       pred_ref, h_out_ref, c_out_ref,
                       state_scr, xp_scr):
    """One grid point processes U decode steps; LSTM state persists in state_scr."""
    t = pl.program_id(0)
    B = x_ref.shape[1]
    H = whh0_ref.shape[0]
    G = 4 * H
    Vp = wfc_ref.shape[1]

    # ---- initialize the packed live state [h0 | h1 | c0 | c1] at the first chunk ----
    @pl.when(t == 0)
    def _():
        state_scr[...] = jnp.concatenate(
            [h_init_ref[0], h_init_ref[1], c_init_ref[0], c_init_ref[1]], axis=1)

    state = state_scr[...]                       # (B, 4H): one lane-dense tile
    h0 = state[:, 0 * H:1 * H]
    h1 = state[:, 1 * H:2 * H]
    c0 = state[:, 2 * H:3 * H]
    c1 = state[:, 3 * H:4 * H]

    # ---- loop-invariant values hoisted out of the per-token loop ----
    whh0 = whh0_ref[...]
    wih1 = wih1_ref[...]
    whh1 = whh1_ref[...]
    wfc = wfc_ref[...]
    b1b = jnp.broadcast_to(b1_ref[...], (B, G)).astype(jnp.float32)
    bfcb = jnp.broadcast_to(bfc_ref[...], (B, Vp)).astype(jnp.float32)
    lane = lax.broadcasted_iota(jnp.int32, (B, G), 1)
    is_g = (lane >= 2 * H) & (lane < 3 * H)      # gate order i, f, g, o

    # ---- layer-0 input projection for the whole chunk: one bigger MXU matmul,
    #      off the serial recurrent dependency chain ----
    x_chunk = x_ref[...]                                              # (U, B, E) bf16
    xp = jnp.dot(x_chunk.reshape(U * B, x_chunk.shape[-1]), wih0_ref[...],
                 preferred_element_type=jnp.float32)
    xp = xp + jnp.broadcast_to(b0_ref[...], (U * B, G)).astype(jnp.float32)
    xp_scr[...] = xp.reshape(U, B, G)
    # nn.Dropout on the embedded input is identity at inference.

    def gates_to_hc(gates, c_prev):
        # Full-vreg activations (EUP) + lane-mask select; then 32-lane gate slices.
        sig = jax.nn.sigmoid(gates)
        tnh = jnp.tanh(gates)
        act = jnp.where(is_g, tnh, sig)
        i = act[:, 0 * H:1 * H]
        f = act[:, 1 * H:2 * H]
        g = act[:, 2 * H:3 * H]
        o = act[:, 3 * H:4 * H]
        c_new = f * c_prev + i * g
        h_new = o * jnp.tanh(c_new)
        return h_new, c_new

    ragged = (T % U) != 0                        # Python-level: only emit masking if needed

    def step(u, carry):
        h0p, c0p, h1p, c1p = carry
        # Layer 0: only h_prev @ W_hh0 is on the recurrent chain.
        gates0 = xp_scr[u] + jnp.dot(h0p.astype(MXU_DTYPE), whh0,
                                     preferred_element_type=jnp.float32)
        h0n, c0n = gates_to_hc(gates0, c0p)
        # Layer 1.
        gates1 = (jnp.dot(h0n.astype(MXU_DTYPE), wih1,
                          preferred_element_type=jnp.float32)
                  + jnp.dot(h1p.astype(MXU_DTYPE), whh1,
                            preferred_element_type=jnp.float32)
                  + b1b)
        h1n, c1n = gates_to_hc(gates1, c1p)
        # fc_out -> lane-dense (B, Vp) logits; full-vreg store.
        pred_ref[u] = (jnp.dot(h1n.astype(MXU_DTYPE), wfc,
                               preferred_element_type=jnp.float32) + bfcb)
        if ragged:
            valid = (t * U + u) < T              # padded steps: keep previous state
            h0n = jnp.where(valid, h0n, h0p)
            c0n = jnp.where(valid, c0n, c0p)
            h1n = jnp.where(valid, h1n, h1p)
            c1n = jnp.where(valid, c1n, c1p)
        return h0n, c0n, h1n, c1n

    h0, c0, h1, c1 = lax.fori_loop(0, U, step, (h0, c0, h1, c1), unroll=(U <= 32))

    # One unmasked (B, 4H) store carries the state to the next chunk.
    state_scr[...] = jnp.concatenate([h0, h1, c0, c1], axis=1)

    # HBM writeback of the final hidden/cell happens only once, at the last chunk.
    @pl.when(t == pl.num_programs(0) - 1)
    def _():
        h_out_ref[0] = h0
        h_out_ref[1] = h1
        c_out_ref[0] = c0
        c_out_ref[1] = c1


def prepare_params(params, lane=128):
    """Lane-pad the vocab-sized tensors and cast MXU weight operands to MXU_DTYPE."""
    V, E = params["emb"].shape
    H = params["w_hh0"].shape[0]
    Vp = _round_up(V, lane)
    wfc_p = jnp.zeros((H, Vp), jnp.float32).at[:, :V].set(params["w_fc"])
    bfc_p = jnp.zeros((1, Vp), jnp.float32).at[:, :V].set(params["b_fc"])
    cast = lambda a: a.astype(MXU_DTYPE)
    return {
        "output_dim": V,
        "emb": cast(params["emb"]),                     # gathered in the wrapper (teacher-forced)
        "w_ih0": cast(params["w_ih0"]),                 # (E, 4H)
        "w_hh0": cast(params["w_hh0"]),                 # (H, 4H)
        "b0": params["b0"].astype(jnp.float32),         # (1, 4H)  = b_ih0 + b_hh0
        "w_ih1": cast(params["w_ih1"]),
        "w_hh1": cast(params["w_hh1"]),
        "b1": params["b1"].astype(jnp.float32),
        "w_fc": cast(wfc_p),                            # (H, Vp) lane-padded
        "b_fc": bfc_p,                                  # (1, Vp)
    }


def decoder_rnn_decode(ids_seq, hidden, cell, kparams, *, max_chunk_bytes=2 * 1024 * 1024):
    """Run T teacher-forced decode steps in one pallas_call.

    ids_seq: (T, B) int32; hidden/cell: (n_layers=2, B, H) f32.
    Returns (logits (T, B, V), hidden, cell).  T == 1 reproduces DecoderRNN.forward.
    """
    T, B = ids_seq.shape
    n_layers, _, H = hidden.shape
    assert n_layers == 2, "kernel is specialized for the module's n_layers = 2"
    V = kparams["output_dim"]
    E = kparams["w_ih0"].shape[0]
    Vp = kparams["w_fc"].shape[1]
    G = 4 * H

    # Teacher-forced decode: gather all embedded tokens up front; removes the per-step
    # ids DMA and the in-kernel one-hot embedding matmul from the serial chain.
    x_seq = jnp.take(kparams["emb"], ids_seq.astype(jnp.int32), axis=0)   # (T, B, E)

    # Tokens per grid point: amortize the per-grid-step fixed cost while keeping the
    # VMEM-resident logits chunk small enough for v7x (64 MiB physical VMEM).
    U = max(1, min(T, max_chunk_bytes // (B * Vp * 4), 256))
    n_chunks = pl.cdiv(T, U)
    T_pad = n_chunks * U
    if T_pad != T:
        x_seq = jnp.concatenate(
            [x_seq, jnp.zeros((T_pad - T, B, E), x_seq.dtype)], axis=0)

    hidden = hidden.astype(jnp.float32)
    cell = cell.astype(jnp.float32)

    const2 = lambda t: (0, 0)
    const3 = lambda t: (0, 0, 0)
    grid_spec = pltpu.PrefetchScalarGridSpec(
        num_scalar_prefetch=0,
        grid=(n_chunks,),
        in_specs=[
            pl.BlockSpec((U, B, E), lambda t: (t, 0, 0)),   # embedded tokens, one chunk/grid pt
            pl.BlockSpec((E, G), const2),                   # W_ih0  (VMEM-resident, DMA'd once)
            pl.BlockSpec((H, G), const2),                   # W_hh0
            pl.BlockSpec((1, G), const2),                   # b0
            pl.BlockSpec((H, G), const2),                   # W_ih1
            pl.BlockSpec((H, G), const2),                   # W_hh1
            pl.BlockSpec((1, G), const2),                   # b1
            pl.BlockSpec((H, Vp), const2),                  # fc weight (lane-padded vocab)
            pl.BlockSpec((1, Vp), const2),                  # fc bias
            pl.BlockSpec((n_layers, B, H), const3),         # initial hidden (read at t == 0)
            pl.BlockSpec((n_layers, B, H), const3),         # initial cell
        ],
        out_specs=(
            pl.BlockSpec((U, B, Vp), lambda t: (t, 0, 0)),  # lane-dense logits per chunk
            pl.BlockSpec((n_layers, B, H), const3),         # final hidden (1 HBM writeback)
            pl.BlockSpec((n_layers, B, H), const3),         # final cell
        ),
        scratch_shapes=[
            pltpu.VMEM((B, 4 * H), jnp.float32),            # packed live state [h0|h1|c0|c1]
            pltpu.VMEM((U, B, 4 * H), jnp.float32),         # chunk-level x @ W_ih0 + b0
        ],
    )
    out_shape = (
        jax.ShapeDtypeStruct((T_pad, B, Vp), jnp.float32),
        jax.ShapeDtypeStruct((n_layers, B, H), jnp.float32),
        jax.ShapeDtypeStruct((n_layers, B, H), jnp.float32),
    )

    preds_p, h_out, c_out = pl.pallas_call(
        functools.partial(decoder_rnn_kernel, T, U),
        grid_spec=grid_spec,
        out_shape=out_shape,
        compiler_params=pltpu.CompilerParams(
            dimension_semantics=("arbitrary",),             # sequential: state carries across chunks
            vmem_limit_bytes=32 * 1024 * 1024),
    )(x_seq, kparams["w_ih0"], kparams["w_hh0"], kparams["b0"],
      kparams["w_ih1"], kparams["w_hh1"], kparams["b1"],
      kparams["w_fc"], kparams["b_fc"], hidden, cell)

    # TODO(synk): for multi-sequence decode on v7x, add a leading "parallel" grid axis
    # over independent sequences so both TensorCores are used.
    return preds_p[:T, :, :V], h_out, c_out


def decoder_rnn_forward(ids, hidden, cell, kparams):
    """Single decode step; matches DecoderRNN.forward(input, hidden, cell) in eval mode."""
    preds, h, c = decoder_rnn_decode(ids[None, :], hidden, cell, kparams)
    return preds[0], h, c


# ---------------- pure-JAX f32 reference (PyTorch eval semantics) ----------------
def _ref_step(ids, hidden, cell, params):
    x = params["emb"][ids]                                     # (B, E)

    def cell_fn(x_in, h_prev, c_prev, w_ih, w_hh, b):
        H = h_prev.shape[-1]
        gates = x_in @ w_ih + h_prev @ w_hh + b
        i = jax.nn.sigmoid(gates[:, 0 * H:1 * H])
        f = jax.nn.sigmoid(gates[:, 1 * H:2 * H])
        g = jnp.tanh(gates[:, 2 * H:3 * H])
        o = jax.nn.sigmoid(gates[:, 3 * H:4 * H])
        c_new = f * c_prev + i * g
        return o * jnp.tanh(c_new), c_new

    h0, c0 = cell_fn(x, hidden[0], cell[0], params["w_ih0"], params["w_hh0"], params["b0"])
    h1, c1 = cell_fn(h0, hidden[1], cell[1], params["w_ih1"], params["w_hh1"], params["b1"])
    pred = h1 @ params["w_fc"] + params["b_fc"]
    return pred, jnp.stack([h0, h1]), jnp.stack([c0, c1])


if __name__ == "__main__":
    output_dim = 40      # vocabulary size
    emb_dim = 32
    hid_dim = 32
    n_layers = 2
    batch = 8
    T = 8                # decode steps fused into one kernel launch

    key = jax.random.PRNGKey(0)
    ks = jax.random.split(key, 14)
    s = 0.1
    params = {
        "emb":   jax.random.normal(ks[0], (output_dim, emb_dim), jnp.float32) * s,
        # LSTM layer 0 (emb_dim -> hid_dim); weights stored (in, 4*hid); b = b_ih + b_hh
        "w_ih0": jax.random.normal(ks[1], (emb_dim, 4 * hid_dim), jnp.float32) * s,
        "w_hh0": jax.random.normal(ks[2], (hid_dim, 4 * hid_dim), jnp.float32) * s,
        "b0":    jax.random.normal(ks[3], (1, 4 * hid_dim), jnp.float32) * s,
        # LSTM layer 1 (hid_dim -> hid_dim)
        "w_ih1": jax.random.normal(ks[4], (hid_dim, 4 * hid_dim), jnp.float32) * s,
        "w_hh1": jax.random.normal(ks[5], (hid_dim, 4 * hid_dim), jnp.float32) * s,
        "b1":    jax.random.normal(ks[6], (1, 4 * hid_dim), jnp.float32) * s,
        # fc_out (hid_dim -> output_dim)
        "w_fc":  jax.random.normal(ks[7], (hid_dim, output_dim), jnp.float32) * s,
        "b_fc":  jax.random.normal(ks[8], (1, output_dim), jnp.float32) * s,
    }
    kparams = prepare_params(params)

    ids = jax.random.randint(ks[9], (batch,), 0, output_dim, jnp.int32)
    hidden = jax.random.normal(ks[10], (n_layers, batch, hid_dim), jnp.float32)
    cell = jax.random.normal(ks[11], (n_layers, batch, hid_dim), jnp.float32)

    # bf16 MXU operands => looser tolerance vs. the f32 reference (deliberate; see review).
    ATOL = RTOL = 3e-2

    # --- single step (exactly DecoderRNN.forward) ---
    pred, h_out, c_out = decoder_rnn_forward(ids, hidden, cell, kparams)
    jax.block_until_ready((pred, h_out, c_out))
    assert pred.shape == (batch, output_dim)
    assert h_out.shape == (n_layers, batch, hid_dim)
    assert c_out.shape == (n_layers, batch, hid_dim)

    pred_r, h_r, c_r = _ref_step(ids, hidden, cell, params)
    assert bool(jnp.allclose(pred, pred_r, atol=ATOL, rtol=RTOL))
    assert bool(jnp.allclose(h_out, h_r, atol=ATOL, rtol=RTOL))
    assert bool(jnp.allclose(c_out, c_r, atol=ATOL, rtol=RTOL))

    # --- T fused decode steps in one launch, vs. calling the module T times ---
    ids_seq = jax.random.randint(ks[12], (T, batch), 0, output_dim, jnp.int32)
    preds_T, h_T, c_T = decoder_rnn_decode(ids_seq, hidden, cell, kparams)
    jax.block_until_ready((preds_T, h_T, c_T))
    h_ref, c_ref = hidden, cell
    for t in range(T):
        p_ref, h_ref, c_ref = _ref_step(ids_seq[t], h_ref, c_ref, params)
        assert bool(jnp.allclose(preds_T[t], p_ref, atol=ATOL, rtol=RTOL))
    assert bool(jnp.allclose(h_T, h_ref, atol=ATOL, rtol=RTOL))
    assert bool(jnp.allclose(c_T, c_ref, atol=ATOL, rtol=RTOL))

    # --- multi-chunk + ragged path (forces U=2 over T=5 steps; state carried across chunks) ---
    T2 = 5
    ids_seq2 = jax.random.randint(ks[13], (T2, batch), 0, output_dim, jnp.int32)
    preds_R, h_R, c_R = decoder_rnn_decode(ids_seq2, hidden, cell, kparams,
                                           max_chunk_bytes=2 * batch * 128 * 4)
    jax.block_until_ready((preds_R, h_R, c_R))
    h_ref, c_ref = hidden, cell
    for t in range(T2):
        p_ref, h_ref, c_ref = _ref_step(ids_seq2[t], h_ref, c_ref, params)
        assert bool(jnp.allclose(preds_R[t], p_ref, atol=ATOL, rtol=RTOL))
    assert bool(jnp.allclose(h_R, h_ref, atol=ATOL, rtol=RTOL))
    assert bool(jnp.allclose(c_R, c_ref, atol=ATOL, rtol=RTOL))

    print("KERNEL_OK")
</pallas_src>

<mosaic_0001>
module attributes {stable_mosaic.version = 11 : i64} {
  func.func @decoder_rnn_kernel(%arg0: i32, %arg1: memref<1x8x32xbf16, #tpu.memory_space<vmem>>, %arg2: memref<32x128xbf16, #tpu.memory_space<vmem>>, %arg3: memref<32x128xbf16, #tpu.memory_space<vmem>>, %arg4: memref<1x128xf32, #tpu.memory_space<vmem>>, %arg5: memref<32x128xbf16, #tpu.memory_space<vmem>>, %arg6: memref<32x128xbf16, #tpu.memory_space<vmem>>, %arg7: memref<1x128xf32, #tpu.memory_space<vmem>>, %arg8: memref<32x128xbf16, #tpu.memory_space<vmem>>, %arg9: memref<1x128xf32, #tpu.memory_space<vmem>>, %arg10: memref<2x8x32xf32, #tpu.memory_space<vmem>>, %arg11: memref<2x8x32xf32, #tpu.memory_space<vmem>>, %arg12: memref<1x8x128xf32, #tpu.memory_space<vmem>>, %arg13: memref<2x8x32xf32, #tpu.memory_space<vmem>>, %arg14: memref<2x8x32xf32, #tpu.memory_space<vmem>>, %arg15: memref<8x128xf32, #tpu.memory_space<vmem>>, %arg16: memref<1x8x128xf32, #tpu.memory_space<vmem>>) attributes {dimension_semantics = [#tpu.dimension_semantics<arbitrary>], iteration_bounds = array<i64: 1>, scalar_prefetch = 0 : i64, scratch_operands = 2 : i64, tpu.core_type = #tpu.core_type<tc>, window_params = [{transform_indices = @transform_0, window_bounds = array<i64: 1, 8, 32>}, {pipeline_mode = #tpu.pipeline_mode<synchronous>, transform_indices = @transform_1, window_bounds = array<i64: 32, 128>}, {pipeline_mode = #tpu.pipeline_mode<synchronous>, transform_indices = @transform_2, window_bounds = array<i64: 32, 128>}, {pipeline_mode = #tpu.pipeline_mode<synchronous>, transform_indices = @transform_3, window_bounds = array<i64: 1, 128>}, {pipeline_mode = #tpu.pipeline_mode<synchronous>, transform_indices = @transform_4, window_bounds = array<i64: 32, 128>}, {pipeline_mode = #tpu.pipeline_mode<synchronous>, transform_indices = @transform_5, window_bounds = array<i64: 32, 128>}, {pipeline_mode = #tpu.pipeline_mode<synchronous>, transform_indices = @transform_6, window_bounds = array<i64: 1, 128>}, {pipeline_mode = #tpu.pipeline_mode<synchronous>, transform_indices = @transform_7, window_bounds = array<i64: 32, 128>}, {pipeline_mode = #tpu.pipeline_mode<synchronous>, transform_indices = @transform_8, window_bounds = array<i64: 1, 128>}, {pipeline_mode = #tpu.pipeline_mode<synchronous>, transform_indices = @transform_9, window_bounds = array<i64: 2, 8, 32>}, {pipeline_mode = #tpu.pipeline_mode<synchronous>, transform_indices = @transform_10, window_bounds = array<i64: 2, 8, 32>}, {transform_indices = @transform_11, window_bounds = array<i64: 1, 8, 128>}, {pipeline_mode = #tpu.pipeline_mode<synchronous>, transform_indices = @transform_12, window_bounds = array<i64: 2, 8, 32>}, {pipeline_mode = #tpu.pipeline_mode<synchronous>, transform_indices = @transform_13, window_bounds = array<i64: 2, 8, 32>}]} {
    %c0_i32 = arith.constant 0 : i32
    %0 = arith.cmpi eq, %arg0, %c0_i32 : i32
    %1 = arith.extui %0 : i1 to i32
    %c0_i32_0 = arith.constant 0 : i32
    %2 = arith.cmpi ne, %1, %c0_i32_0 : i32
    scf.if %2 {
      %c0_39 = arith.constant 0 : index
      %c0_40 = arith.constant 0 : index
      %c0_41 = arith.constant 0 : index
      %90 = vector.load %arg10[%c0_39, %c0_40, %c0_41] : memref<2x8x32xf32, #tpu.memory_space<vmem>>, vector<1x8x32xf32>
      %91 = vector.shape_cast %90 : vector<1x8x32xf32> to vector<8x32xf32>
      %c1 = arith.constant 1 : index
      %c0_42 = arith.constant 0 : index
      %c0_43 = arith.constant 0 : index
      %92 = vector.load %arg10[%c1, %c0_42, %c0_43] : memref<2x8x32xf32, #tpu.memory_space<vmem>>, vector<1x8x32xf32>
      %93 = vector.shape_cast %92 : vector<1x8x32xf32> to vector<8x32xf32>
      %c0_44 = arith.constant 0 : index
      %c0_45 = arith.constant 0 : index
      %c0_46 = arith.constant 0 : index
      %94 = vector.load %arg11[%c0_44, %c0_45, %c0_46] : memref<2x8x32xf32, #tpu.memory_space<vmem>>, vector<1x8x32xf32>
      %95 = vector.shape_cast %94 : vector<1x8x32xf32> to vector<8x32xf32>
      %c1_47 = arith.constant 1 : index
      %c0_48 = arith.constant 0 : index
      %c0_49 = arith.constant 0 : index
      %96 = vector.load %arg11[%c1_47, %c0_48, %c0_49] : memref<2x8x32xf32, #tpu.memory_space<vmem>>, vector<1x8x32xf32>
      %97 = vector.shape_cast %96 : vector<1x8x32xf32> to vector<8x32xf32>
      %98 = tpu.concatenate %91, %93, %95, %97 in 1 : vector<8x32xf32>, vector<8x32xf32>, vector<8x32xf32>, vector<8x32xf32> -> vector<8x128xf32>
      %c0_50 = arith.constant 0 : index
      %c0_51 = arith.constant 0 : index
      %99 = vector.load %arg15[%c0_50, %c0_51] : memref<8x128xf32, #tpu.memory_space<vmem>>, vector<8x128xf32>
      tpu.vector_store %arg15[%c0_50, %c0_51], %98 {strides = array<i32>} : memref<8x128xf32, #tpu.memory_space<vmem>>, vector<8x128xf32>,
    } else {
    }
    %c0 = arith.constant 0 : index
    %c0_1 = arith.constant 0 : index
    %3 = vector.load %arg15[%c0, %c0_1] : memref<8x128xf32, #tpu.memory_space<vmem>>, vector<8x128xf32>
    %4 = vector.extract_strided_slice %3 {offsets = [0, 0], sizes = [8, 32], strides = [1, 1]} : vector<8x128xf32> to vector<8x32xf32>
    %5 = vector.extract_strided_slice %3 {offsets = [0, 32], sizes = [8, 32], strides = [1, 1]} : vector<8x128xf32> to vector<8x32xf32>
    %6 = vector.extract_strided_slice %3 {offsets = [0, 64], sizes = [8, 32], strides = [1, 1]} : vector<8x128xf32> to vector<8x32xf32>
    %7 = vector.extract_strided_slice %3 {offsets = [0, 96], sizes = [8, 32], strides = [1, 1]} : vector<8x128xf32> to vector<8x32xf32>
    %c0_2 = arith.constant 0 : index
    %c0_3 = arith.constant 0 : index
    %8 = vector.load %arg3[%c0_2, %c0_3] : memref<32x128xbf16, #tpu.memory_space<vmem>>, vector<32x128xbf16>
    %c0_4 = arith.constant 0 : index
    %c0_5 = arith.constant 0 : index
    %9 = vector.load %arg5[%c0_4, %c0_5] : memref<32x128xbf16, #tpu.memory_space<vmem>>, vector<32x128xbf16>
    %c0_6 = arith.constant 0 : index
    %c0_7 = arith.constant 0 : index
    %10 = vector.load %arg6[%c0_6, %c0_7] : memref<32x128xbf16, #tpu.memory_space<vmem>>, vector<32x128xbf16>
    %c0_8 = arith.constant 0 : index
    %c0_9 = arith.constant 0 : index
    %11 = vector.load %arg8[%c0_8, %c0_9] : memref<32x128xbf16, #tpu.memory_space<vmem>>, vector<32x128xbf16>
    %c0_10 = arith.constant 0 : index
    %c0_11 = arith.constant 0 : index
    %12 = vector.load %arg7[%c0_10, %c0_11] : memref<1x128xf32, #tpu.memory_space<vmem>>, vector<1x128xf32>
    %13 = vector.shape_cast %12 : vector<1x128xf32> to vector<1x128xf32>
    %14 = vector.broadcast %13 : vector<1x128xf32> to vector<8x128xf32>
    %c0_12 = arith.constant 0 : index
    %c0_13 = arith.constant 0 : index
    %15 = vector.load %arg9[%c0_12, %c0_13] : memref<1x128xf32, #tpu.memory_space<vmem>>, vector<1x128xf32>
    %16 = vector.shape_cast %15 : vector<1x128xf32> to vector<1x128xf32>
    %17 = vector.broadcast %16 : vector<1x128xf32> to vector<8x128xf32>
    %18 = tpu.iota {dimensions = array<i32: 1>} : vector<8x128xi32>
    %c64_i32 = arith.constant 64 : i32
    %19 = vector.broadcast %c64_i32 : i32 to vector<8x128xi32>
    %20 = arith.cmpi sge, %18, %19 : vector<8x128xi32>
    %c96_i32 = arith.constant 96 : i32
    %21 = vector.broadcast %c96_i32 : i32 to vector<8x128xi32>
    %22 = arith.cmpi slt, %18, %21 : vector<8x128xi32>
    %23 = arith.andi %20, %22 : vector<8x128xi1>
    %c0_14 = arith.constant 0 : index
    %c0_15 = arith.constant 0 : index
    %c0_16 = arith.constant 0 : index
    %24 = vector.load %arg1[%c0_14, %c0_15, %c0_16] : memref<1x8x32xbf16, #tpu.memory_space<vmem>>, vector<1x8x32xbf16>
    %25 = vector.shape_cast %24 : vector<1x8x32xbf16> to vector<8x32xbf16>
    %c0_17 = arith.constant 0 : index
    %c0_18 = arith.constant 0 : index
    %26 = vector.load %arg2[%c0_17, %c0_18] : memref<32x128xbf16, #tpu.memory_space<vmem>>, vector<32x128xbf16>
    %cst = arith.constant dense<0.000000e+00> : vector<8x128xf32>
    %27 = tpu.matmul %25, %26, %cst {dimension_numbers = #tpu.dot_dimension_numbers<[1], [0], [0], [1], [0, 0, 1, 1], [], []>} : vector<8x32xbf16>, vector<32x128xbf16>, vector<8x128xf32> -> vector<8x128xf32>
    %c0_19 = arith.constant 0 : index
    %c0_20 = arith.constant 0 : index
    %28 = vector.load %arg4[%c0_19, %c0_20] : memref<1x128xf32, #tpu.memory_space<vmem>>, vector<1x128xf32>
    %29 = vector.shape_cast %28 : vector<1x128xf32> to vector<1x128xf32>
    %30 = vector.broadcast %29 : vector<1x128xf32> to vector<8x128xf32>
    %31 = arith.addf %27, %30 : vector<8x128xf32>
    %32 = vector.shape_cast %31 : vector<8x128xf32> to vector<1x8x128xf32>
    %c0_21 = arith.constant 0 : index
    %c0_22 = arith.constant 0 : index
    %c0_23 = arith.constant 0 : index
    %33 = vector.load %arg16[%c0_21, %c0_22, %c0_23] : memref<1x8x128xf32, #tpu.memory_space<vmem>>, vector<1x8x128xf32>
    tpu.vector_store %arg16[%c0_21, %c0_22, %c0_23], %32 {strides = array<i32>} : memref<1x8x128xf32, #tpu.memory_space<vmem>>, vector<1x8x128xf32>,
    %c0_i32_24 = arith.constant 0 : i32
    %34 = arith.index_cast %c0_i32_24 : i32 to index
    %c0_25 = arith.constant 0 : index
    %c0_26 = arith.constant 0 : index
    %35 = vector.load %arg16[%34, %c0_25, %c0_26] : memref<1x8x128xf32, #tpu.memory_space<vmem>>, vector<1x8x128xf32>
    %36 = vector.shape_cast %35 : vector<1x8x128xf32> to vector<8x128xf32>
    %37 = arith.truncf %4 : vector<8x32xf32> to vector<8x32xbf16>
    %cst_27 = arith.constant dense<0.000000e+00> : vector<8x128xf32>
    %38 = tpu.matmul %37, %8, %cst_27 {dimension_numbers = #tpu.dot_dimension_numbers<[1], [0], [0], [1], [0, 0, 1, 1], [], []>} : vector<8x32xbf16>, vector<32x128xbf16>, vector<8x128xf32> -> vector<8x128xf32>
    %39 = arith.addf %36, %38 : vector<8x128xf32>
    %40 = arith.negf %39 : vector<8x128xf32>
    %41 = math.exp %40 : vector<8x128xf32>
    %cst_28 = arith.constant 1.000000e+00 : f32
    %42 = vector.broadcast %cst_28 : f32 to vector<8x128xf32>
    %43 = arith.addf %42, %41 : vector<8x128xf32>
    %44 = arith.divf %42, %43 : vector<8x128xf32>
    %45 = math.tanh %39 : vector<8x128xf32>
    %46 = arith.select %23, %45, %44 : vector<8x128xi1>, vector<8x128xf32>
    %47 = vector.extract_strided_slice %46 {offsets = [0, 0], sizes = [8, 32], strides = [1, 1]} : vector<8x128xf32> to vector<8x32xf32>
    %48 = vector.extract_strided_slice %46 {offsets = [0, 32], sizes = [8, 32], strides = [1, 1]} : vector<8x128xf32> to vector<8x32xf32>
    %49 = vector.extract_strided_slice %46 {offsets = [0, 64], sizes = [8, 32], strides = [1, 1]} : vector<8x128xf32> to vector<8x32xf32>
    %50 = vector.extract_strided_slice %46 {offsets = [0, 96], sizes = [8, 32], strides = [1, 1]} : vector<8x128xf32> to vector<8x32xf32>
    %51 = arith.mulf %48, %6 : vector<8x32xf32>
    %52 = arith.mulf %47, %49 : vector<8x32xf32>
    %53 = arith.addf %51, %52 : vector<8x32xf32>
    %54 = math.tanh %53 : vector<8x32xf32>
    %55 = arith.mulf %50, %54 : vector<8x32xf32>
    %56 = arith.truncf %55 : vector<8x32xf32> to vector<8x32xbf16>
    %cst_29 = arith.constant dense<0.000000e+00> : vector<8x128xf32>
    %57 = tpu.matmul %56, %9, %cst_29 {dimension_numbers = #tpu.dot_dimension_numbers<[1], [0], [0], [1], [0, 0, 1, 1], [], []>} : vector<8x32xbf16>, vector<32x128xbf16>, vector<8x128xf32> -> vector<8x128xf32>
    %58 = arith.truncf %5 : vector<8x32xf32> to vector<8x32xbf16>
    %cst_30 = arith.constant dense<0.000000e+00> : vector<8x128xf32>
    %59 = tpu.matmul %58, %10, %cst_30 {dimension_numbers = #tpu.dot_dimension_numbers<[1], [0], [0], [1], [0, 0, 1, 1], [], []>} : vector<8x32xbf16>, vector<32x128xbf16>, vector<8x128xf32> -> vector<8x128xf32>
    %60 = arith.addf %57, %59 : vector<8x128xf32>
    %61 = arith.addf %60, %14 : vector<8x128xf32>
    %62 = arith.negf %61 : vector<8x128xf32>
    %63 = math.exp %62 : vector<8x128xf32>
    %cst_31 = arith.constant 1.000000e+00 : f32
    %64 = vector.broadcast %cst_31 : f32 to vector<8x128xf32>
    %65 = arith.addf %64, %63 : vector<8x128xf32>
    %66 = arith.divf %64, %65 : vector<8x128xf32>
    %67 = math.tanh %61 : vector<8x128xf32>
    %68 = arith.select %23, %67, %66 : vector<8x128xi1>, vector<8x128xf32>
    %69 = vector.extract_strided_slice %68 {offsets = [0, 0], sizes = [8, 32], strides = [1, 1]} : vector<8x128xf32> to vector<8x32xf32>
    %70 = vector.extract_strided_slice %68 {offsets = [0, 32], sizes = [8, 32], strides = [1, 1]} : vector<8x128xf32> to vector<8x32xf32>
    %71 = vector.extract_strided_slice %68 {offsets = [0, 64], sizes = [8, 32], strides = [1, 1]} : vector<8x128xf32> to vector<8x32xf32>
    %72 = vector.extract_strided_slice %68 {offsets = [0, 96], sizes = [8, 32], strides = [1, 1]} : vector<8x128xf32> to vector<8x32xf32>
    %73 = arith.mulf %70, %7 : vector<8x32xf32>
    %74 = arith.mulf %69, %71 : vector<8x32xf32>
    %75 = arith.addf %73, %74 : vector<8x32xf32>
    %76 = math.tanh %75 : vector<8x32xf32>
    %77 = arith.mulf %72, %76 : vector<8x32xf32>
    %78 = arith.truncf %77 : vector<8x32xf32> to vector<8x32xbf16>
    %cst_32 = arith.constant dense<0.000000e+00> : vector<8x128xf32>
    %79 = tpu.matmul %78, %11, %cst_32 {dimension_numbers = #tpu.dot_dimension_numbers<[1], [0], [0], [1], [0, 0, 1, 1], [], []>} : vector<8x32xbf16>, vector<32x128xbf16>, vector<8x128xf32> -> vector<8x128xf32>
    %80 = arith.addf %79, %17 : vector<8x128xf32>
    %81 = arith.index_cast %c0_i32_24 : i32 to index
    %c0_33 = arith.constant 0 : index
    %c0_34 = arith.constant 0 : index
    %82 = vector.load %arg12[%81, %c0_33, %c0_34] : memref<1x8x128xf32, #tpu.memory_space<vmem>>, vector<1x8x128xf32>
    %83 = vector.shape_cast %82 : vector<1x8x128xf32> to vector<8x128xf32>
    %84 = vector.shape_cast %80 : vector<8x128xf32> to vector<1x8x128xf32>
    tpu.vector_store %arg12[%81, %c0_33, %c0_34], %84 {strides = array<i32>} : memref<1x8x128xf32, #tpu.memory_space<vmem>>, vector<1x8x128xf32>,
    %c1_i32 = arith.constant 1 : i32
    %85 = tpu.concatenate %55, %77, %53, %75 in 1 : vector<8x32xf32>, vector<8x32xf32>, vector<8x32xf32>, vector<8x32xf32> -> vector<8x128xf32>
    %c0_35 = arith.constant 0 : index
    %c0_36 = arith.constant 0 : index
    %86 = vector.load %arg15[%c0_35, %c0_36] : memref<8x128xf32, #tpu.memory_space<vmem>>, vector<8x128xf32>
    tpu.vector_store %arg15[%c0_35, %c0_36], %85 {strides = array<i32>} : memref<8x128xf32, #tpu.memory_space<vmem>>, vector<8x128xf32>,
    %c0_i32_37 = arith.constant 0 : i32
    %87 = arith.cmpi eq, %arg0, %c0_i32_37 : i32
    %88 = arith.extui %87 : i1 to i32
    %c0_i32_38 = arith.constant 0 : i32
    %89 = arith.cmpi ne, %88, %c0_i32_38 : i32
    scf.if %89 {
      %c0_39 = arith.constant 0 : index
      %c0_40 = arith.constant 0 : index
      %c0_41 = arith.constant 0 : index
      %90 = vector.load %arg13[%c0_39, %c0_40, %c0_41] : memref<2x8x32xf32, #tpu.memory_space<vmem>>, vector<1x8x32xf32>
      %91 = vector.shape_cast %90 : vector<1x8x32xf32> to vector<8x32xf32>
      %92 = vector.shape_cast %55 : vector<8x32xf32> to vector<1x8x32xf32>
      tpu.vector_store %arg13[%c0_39, %c0_40, %c0_41], %92 {strides = array<i32>} : memref<2x8x32xf32, #tpu.memory_space<vmem>>, vector<1x8x32xf32>,
      %c1 = arith.constant 1 : index
      %c0_42 = arith.constant 0 : index
      %c0_43 = arith.constant 0 : index
      %93 = vector.load %arg13[%c1, %c0_42, %c0_43] : memref<2x8x32xf32, #tpu.memory_space<vmem>>, vector<1x8x32xf32>
      %94 = vector.shape_cast %93 : vector<1x8x32xf32> to vector<8x32xf32>
      %95 = vector.shape_cast %77 : vector<8x32xf32> to vector<1x8x32xf32>
      tpu.vector_store %arg13[%c1, %c0_42, %c0_43], %95 {strides = array<i32>} : memref<2x8x32xf32, #tpu.memory_space<vmem>>, vector<1x8x32xf32>,
      %c0_44 = arith.constant 0 : index
      %c0_45 = arith.constant 0 : index
      %c0_46 = arith.constant 0 : index
      %96 = vector.load %arg14[%c0_44, %c0_45, %c0_46] : memref<2x8x32xf32, #tpu.memory_space<vmem>>, vector<1x8x32xf32>
      %97 = vector.shape_cast %96 : vector<1x8x32xf32> to vector<8x32xf32>
      %98 = vector.shape_cast %53 : vector<8x32xf32> to vector<1x8x32xf32>
      tpu.vector_store %arg14[%c0_44, %c0_45, %c0_46], %98 {strides = array<i32>} : memref<2x8x32xf32, #tpu.memory_space<vmem>>, vector<1x8x32xf32>,
      %c1_47 = arith.constant 1 : index
      %c0_48 = arith.constant 0 : index
      %c0_49 = arith.constant 0 : index
      %99 = vector.load %arg14[%c1_47, %c0_48, %c0_49] : memref<2x8x32xf32, #tpu.memory_space<vmem>>, vector<1x8x32xf32>
      %100 = vector.shape_cast %99 : vector<1x8x32xf32> to vector<8x32xf32>
      %101 = vector.shape_cast %75 : vector<8x32xf32> to vector<1x8x32xf32>
      tpu.vector_store %arg14[%c1_47, %c0_48, %c0_49], %101 {strides = array<i32>} : memref<2x8x32xf32, #tpu.memory_space<vmem>>, vector<1x8x32xf32>,
    } else {
    }
    return
  }
  func.func @transform_0(%arg0: i32) -> (i32, i32, i32) {
    %c0_i32 = arith.constant 0 : i32
    %c0_i32_0 = arith.constant 0 : i32
    %c0_i32_1 = arith.constant 0 : i32
    return %arg0, %c0_i32, %c0_i32_0 : i32, i32, i32
  }
  func.func @transform_1(%arg0: i32) -> (i32, i32) {
    %c0_i32 = arith.constant 0 : i32
    %c0_i32_0 = arith.constant 0 : i32
    %c0_i32_1 = arith.constant 0 : i32
    return %c0_i32, %c0_i32_0 : i32, i32
  }
  func.func @transform_2(%arg0: i32) -> (i32, i32) {
    %c0_i32 = arith.constant 0 : i32
    %c0_i32_0 = arith.constant 0 : i32
    %c0_i32_1 = arith.constant 0 : i32
    return %c0_i32, %c0_i32_0 : i32, i32
  }
  func.func @transform_3(%arg0: i32) -> (i32, i32) {
    %c0_i32 = arith.constant 0 : i32
    %c0_i32_0 = arith.constant 0 : i32
    %c0_i32_1 = arith.constant 0 : i32
    return %c0_i32, %c0_i32_0 : i32, i32
  }
  func.func @transform_4(%arg0: i32) -> (i32, i32) {
    %c0_i32 = arith.constant 0 : i32
    %c0_i32_0 = arith.constant 0 : i32
    %c0_i32_1 = arith.constant 0 : i32
    return %c0_i32, %c0_i32_0 : i32, i32
  }
  func.func @transform_5(%arg0: i32) -> (i32, i32) {
    %c0_i32 = arith.constant 0 : i32
    %c0_i32_0 = arith.constant 0 : i32
    %c0_i32_1 = arith.constant 0 : i32
    return %c0_i32, %c0_i32_0 : i32, i32
  }
  func.func @transform_6(%arg0: i32) -> (i32, i32) {
    %c0_i32 = arith.constant 0 : i32
    %c0_i32_0 = arith.constant 0 : i32
    %c0_i32_1 = arith.constant 0 : i32
    return %c0_i32, %c0_i32_0 : i32, i32
  }
  func.func @transform_7(%arg0: i32) -> (i32, i32) {
    %c0_i32 = arith.constant 0 : i32
    %c0_i32_0 = arith.constant 0 : i32
    %c0_i32_1 = arith.constant 0 : i32
    return %c0_i32, %c0_i32_0 : i32, i32
  }
  func.func @transform_8(%arg0: i32) -> (i32, i32) {
    %c0_i32 = arith.constant 0 : i32
    %c0_i32_0 = arith.constant 0 : i32
    %c0_i32_1 = arith.constant 0 : i32
    return %c0_i32, %c0_i32_0 : i32, i32
  }
  func.func @transform_9(%arg0: i32) -> (i32, i32, i32) {
    %c0_i32 = arith.constant 0 : i32
    %c0_i32_0 = arith.constant 0 : i32
    %c0_i32_1 = arith.constant 0 : i32
    %c0_i32_2 = arith.constant 0 : i32
    return %c0_i32, %c0_i32_0, %c0_i32_1 : i32, i32, i32
  }
  func.func @transform_10(%arg0: i32) -> (i32, i32, i32) {
    %c0_i32 = arith.constant 0 : i32
    %c0_i32_0 = arith.constant 0 : i32
    %c0_i32_1 = arith.constant 0 : i32
    %c0_i32_2 = arith.constant 0 : i32
    return %c0_i32, %c0_i32_0, %c0_i32_1 : i32, i32, i32
  }
  func.func @transform_11(%arg0: i32) -> (i32, i32, i32) {
    %c0_i32 = arith.constant 0 : i32
    %c0_i32_0 = arith.constant 0 : i32
    %c0_i32_1 = arith.constant 0 : i32
    return %arg0, %c0_i32, %c0_i32_0 : i32, i32, i32
  }
  func.func @transform_12(%arg0: i32) -> (i32, i32, i32) {
    %c0_i32 = arith.constant 0 : i32
    %c0_i32_0 = arith.constant 0 : i32
    %c0_i32_1 = arith.constant 0 : i32
    %c0_i32_2 = arith.constant 0 : i32
    return %c0_i32, %c0_i32_0, %c0_i32_1 : i32, i32, i32
  }
  func.func @transform_13(%arg0: i32) -> (i32, i32, i32) {
    %c0_i32 = arith.constant 0 : i32
    %c0_i32_0 = arith.constant 0 : i32
    %c0_i32_1 = arith.constant 0 : i32
    %c0_i32_2 = arith.constant 0 : i32
    return %c0_i32, %c0_i32_0, %c0_i32_1 : i32, i32, i32
  }
}

</mosaic_0001>

<llo_original>
// kernel: tpu_custom_call.1
$region0: #{tpu_custom_call.1}
  #allocation0 [shape = 'u32[]', space=smem, size = 0x4, offset = 0x4, fixed_abs, tag = 'smem constant byte address 0x4 - core index']
  #allocation1 [shape = 'u32[144,128]{1,0:T(1,128)}', space=vmem, size = 0x12000, scoped, tag = 'internal scratch']
  #allocation2 [shape = 'f32[8,128]{1,0:T(8,128)}', space=vmem, size = 0x1000, scoped, tag = 'scratch operand']
  #allocation3 [shape = 'f32[1,8,128]{2,1,0:T(8,128)}', space=vmem, size = 0x1000, scoped, tag = 'scratch operand']
  %s0 = inlined_call_operand.hbm [shape: bf16[1,8,32], index: 0, kind: input, shape index: {}]
  %s1 = inlined_call_operand.hbm [shape: bf16[32,128], index: 1, kind: input, shape index: {}]
  %s2 = inlined_call_operand.hbm [shape: bf16[32,128], index: 2, kind: input, shape index: {}]
  %s3 = inlined_call_operand.hbm [shape: f32[1,128], index: 3, kind: input, shape index: {}]
  %s4 = inlined_call_operand.hbm [shape: bf16[32,128], index: 4, kind: input, shape index: {}]
  %s5 = inlined_call_operand.hbm [shape: bf16[32,128], index: 5, kind: input, shape index: {}]
  %s6 = inlined_call_operand.hbm [shape: f32[1,128], index: 6, kind: input, shape index: {}]
  %s7 = inlined_call_operand.hbm [shape: bf16[32,128], index: 7, kind: input, shape index: {}]
  %s8 = inlined_call_operand.hbm [shape: f32[1,128], index: 8, kind: input, shape index: {}]
  %s9 = inlined_call_operand.vmem [shape: f32[2,8,32], index: 9, kind: input, shape index: {}]
  %s10 = inlined_call_operand.hbm [shape: f32[2,8,32], index: 10, kind: input, shape index: {}]
  %s11 = inlined_call_operand.hbm [shape: f32[1,8,128], index: 11, kind: output, shape index: {0}]
  %s12 = inlined_call_operand.hbm [shape: f32[2,8,32], index: 12, kind: output, shape index: {1}]
  %s13 = inlined_call_operand.hbm [shape: f32[2,8,32], index: 13, kind: output, shape index: {2}]
  %14 = xla_tuple %s11, %s12, %s13
  %s15 = sld [smem:[#allocation0]]
  $region118: #{tpu_custom_call.1} parent=0
    _
  %s17 = ssub.s32 1, %s15
  %s18 = scalar_select 0, %s17, %s15
  $region1: #{tpu_custom_call.1} parent=0
    #allocation4 [shape = 'u8[2048]{0}', space=vmem, size = 0x800, scoped, tag = 'input window, operand 0, single buffered']
    #allocation5 [shape = 's32[1]{0}', space=sflag, size = 0x4, scoped, tag = 'scoped memory for tpu_custom_call.1']
    #allocation6 [shape = 's32[1]{0}', space=sflag, size = 0x4, scoped, tag = 'scoped memory for tpu_custom_call.1']
    #allocation7 [shape = 'u8[8192]{0}', space=vmem, size = 0x2000, scoped, tag = 'input window, operand 1, single buffered']
    #allocation8 [shape = 's32[1]{0}', space=sflag, size = 0x4, scoped, tag = 'scoped memory for tpu_custom_call.1']
    #allocation9 [shape = 'u8[8192]{0}', space=vmem, size = 0x2000, scoped, tag = 'input window, operand 2, single buffered']
    #allocation10 [shape = 'u8[512]{0}', space=vmem, size = 0x400, scoped, tag = 'input window, operand 3, single buffered']
    #allocation11 [shape = 's32[1]{0}', space=sflag, size = 0x4, scoped, tag = 'scoped memory for tpu_custom_call.1']
    #allocation12 [shape = 'u8[8192]{0}', space=vmem, size = 0x2000, scoped, tag = 'input window, operand 4, single buffered']
    #allocation13 [shape = 'u8[8192]{0}', space=vmem, size = 0x2000, scoped, tag = 'input window, operand 5, single buffered']
    #allocation14 [shape = 's32[1]{0}', space=sflag, size = 0x4, scoped, tag = 'scoped memory for tpu_custom_call.1']
    #allocation15 [shape = 'u8[512]{0}', space=vmem, size = 0x400, scoped, tag = 'input window, operand 6, single buffered']
    #allocation16 [shape = 'u8[8192]{0}', space=vmem, size = 0x2000, scoped, tag = 'input window, operand 7, single buffered']
    #allocation17 [shape = 's32[1]{0}', space=sflag, size = 0x4, scoped, tag = 'scoped memory for tpu_custom_call.1']
    #allocation18 [shape = 'u8[512]{0}', space=vmem, size = 0x400, scoped, tag = 'input window, operand 8, single buffered']
    #allocation19 [shape = 'u8[8192]{0}', space=vmem, size = 0x2000, scoped, tag = 'input window, operand 10, single buffered']
    #allocation20 [shape = 's32[1]{0}', space=sflag, size = 0x4, scoped, tag = 'scoped memory for tpu_custom_call.1']
    #allocation21 [shape = 'u8[4096]{0}', space=vmem, size = 0x1000, scoped, tag = 'output window, operand 0, single buffered']
    #allocation22 [shape = 'u8[8192]{0}', space=vmem, size = 0x2000, scoped, tag = 'output window, operand 1, single buffered']
    #allocation23 [shape = 's32[1]{0}', space=sflag, size = 0x4, scoped, tag = 'scoped memory for tpu_custom_call.1']
    #allocation24 [shape = 'u8[8192]{0}', space=vmem, size = 0x2000, scoped, tag = 'output window, operand 2, single buffered']
    %19 = vsyncpa [#allocation5], 0
    %20 = vsyncpa [#allocation8], 0
    %21 = vsyncpa [#allocation11], 0
    %22 = vsyncpa [#allocation14], 0
    %23 = vsyncpa [#allocation17], 0
    %24 = vsyncpa [#allocation20], 0
    %25 = vsyncpa [#allocation6], 0
    %26 = vsyncpa [#allocation23], 0
    // Predicated region
    $region2: #{tpu_custom_call.1} parent=1 // pred_check
      _
    $region3: #{tpu_custom_call.1} parent=1 // pred_check_branch
      %28 = sbr.rel (0) target = $region5
    $region4: #{tpu_custom_call.1} parent=1 // pred_region
      %s30 = ssub.s32 64, 64
      %31 = vsyncadd [#allocation5], %s30
      %s33 = sshll.u32 [#allocation4], 4
      %s34 = int_to_ptr.vmem [resolvable:$true] %s33
      %36 = dma.hbm_to_vmem [thread:$0]  %s0, 64, %s34, [#allocation5]
    $region5: #{tpu_custom_call.1} parent=1 // pred_fallthru
      _
    // Predicated region
    $region6: #{tpu_custom_call.1} parent=1 // pred_check
      _
    $region7: #{tpu_custom_call.1} parent=1 // pred_check_branch
      %38 = sbr.rel (0) target = $region9
    $region8: #{tpu_custom_call.1} parent=1 // pred_region
      %s40 = ssub.s32 256, 256
      %41 = vsyncadd [#allocation8], %s40
      %s42 = sshll.u32 [#allocation7], 4
      %s43 = int_to_ptr.vmem [resolvable:$true] %s42
      %48 = dma.hbm_to_vmem [thread:$0]  %s1, 256, %s43, [#allocation8], 64, 64, 4
    $region9: #{tpu_custom_call.1} parent=1 // pred_fallthru
      _
    // Predicated region
    $region10: #{tpu_custom_call.1} parent=1 // pred_check
      _
    $region11: #{tpu_custom_call.1} parent=1 // pred_check_branch
      %50 = sbr.rel (0) target = $region13
    $region12: #{tpu_custom_call.1} parent=1 // pred_region
      %s52 = ssub.s32 256, 256
      %53 = vsyncadd [#allocation8], %s52
      %s54 = sshll.u32 [#allocation9], 4
      %s55 = int_to_ptr.vmem [resolvable:$true] %s54
      %60 = dma.hbm_to_vmem [thread:$0]  %s2, 256, %s55, [#allocation8], 64, 64, 4
    $region13: #{tpu_custom_call.1} parent=1 // pred_fallthru
      _
    // Predicated region
    $region14: #{tpu_custom_call.1} parent=1 // pred_check
      _
    $region15: #{tpu_custom_call.1} parent=1 // pred_check_branch
      %62 = sbr.rel (0) target = $region17
    $region16: #{tpu_custom_call.1} parent=1 // pred_region
      %s64 = ssub.s32 16, 16
      %65 = vsyncadd [#allocation11], %s64
      %s67 = sshll.u32 [#allocation10], 4
      %s68 = int_to_ptr.vmem [resolvable:$true] %s67
      %70 = dma.hbm_to_vmem [thread:$0]  %s3, 16, %s68, [#allocation11]
    $region17: #{tpu_custom_call.1} parent=1 // pred_fallthru
      _
    // Predicated region
    $region18: #{tpu_custom_call.1} parent=1 // pred_check
      _
    $region19: #{tpu_custom_call.1} parent=1 // pred_check_branch
      %72 = sbr.rel (0) target = $region21
    $region20: #{tpu_custom_call.1} parent=1 // pred_region
      %s74 = ssub.s32 256, 256
      %75 = vsyncadd [#allocation11], %s74
      %s76 = sshll.u32 [#allocation12], 4
      %s77 = int_to_ptr.vmem [resolvable:$true] %s76
      %82 = dma.hbm_to_vmem [thread:$0]  %s4, 256, %s77, [#allocation11], 64, 64, 4
    $region21: #{tpu_custom_call.1} parent=1 // pred_fallthru
      _
    // Predicated region
    $region22: #{tpu_custom_call.1} parent=1 // pred_check
      _
    $region23: #{tpu_custom_call.1} parent=1 // pred_check_branch
      %84 = sbr.rel (0) target = $region25
    $region24: #{tpu_custom_call.1} parent=1 // pred_region
      %s86 = ssub.s32 256, 256
      %87 = vsyncadd [#allocation14], %s86
      %s88 = sshll.u32 [#allocation13], 4
      %s89 = int_to_ptr.vmem [resolvable:$true] %s88
      %94 = dma.hbm_to_vmem [thread:$0]  %s5, 256, %s89, [#allocation14], 64, 64, 4
    $region25: #{tpu_custom_call.1} parent=1 // pred_fallthru
      _
    // Predicated region
    $region26: #{tpu_custom_call.1} parent=1 // pred_check
      _
    $region27: #{tpu_custom_call.1} parent=1 // pred_check_branch
      %96 = sbr.rel (0) target = $region29
    $region28: #{tpu_custom_call.1} parent=1 // pred_region
      %s98 = ssub.s32 16, 16
      %99 = vsyncadd [#allocation14], %s98
      %s101 = sshll.u32 [#allocation15], 4
      %s102 = int_to_ptr.vmem [resolvable:$true] %s101
      %104 = dma.hbm_to_vmem [thread:$0]  %s6, 16, %s102, [#allocation14]
    $region29: #{tpu_custom_call.1} parent=1 // pred_fallthru
      _
    // Predicated region
    $region30: #{tpu_custom_call.1} parent=1 // pred_check
      _
    $region31: #{tpu_custom_call.1} parent=1 // pred_check_branch
      %106 = sbr.rel (0) target = $region33
    $region32: #{tpu_custom_call.1} parent=1 // pred_region
      %s108 = ssub.s32 256, 256
      %109 = vsyncadd [#allocation17], %s108
      %s110 = sshll.u32 [#allocation16], 4
      %s111 = int_to_ptr.vmem [resolvable:$true] %s110
      %116 = dma.hbm_to_vmem [thread:$0]  %s7, 256, %s111, [#allocation17], 64, 64, 4
    $region33: #{tpu_custom_call.1} parent=1 // pred_fallthru
      _
    // Predicated region
    $region34: #{tpu_custom_call.1} parent=1 // pred_check
      _
    $region35: #{tpu_custom_call.1} parent=1 // pred_check_branch
      %118 = sbr.rel (0) target = $region37
    $region36: #{tpu_custom_call.1} parent=1 // pred_region
      %s120 = ssub.s32 16, 16
      %121 = vsyncadd [#allocation17], %s120
      %s123 = sshll.u32 [#allocation18], 4
      %s124 = int_to_ptr.vmem [resolvable:$true] %s123
      %126 = dma.hbm_to_vmem [thread:$0]  %s8, 16, %s124, [#allocation17]
    $region37: #{tpu_custom_call.1} parent=1 // pred_fallthru
      _
    // Predicated region
    $region38: #{tpu_custom_call.1} parent=1 // pred_check
      _
    $region39: #{tpu_custom_call.1} parent=1 // pred_check_branch
      %128 = sbr.rel (0) target = $region41
    $region40: #{tpu_custom_call.1} parent=1 // pred_region
      _
    $region41: #{tpu_custom_call.1} parent=1 // pred_fallthru
      _
    // Predicated region
    $region42: #{tpu_custom_call.1} parent=1 // pred_check
      _
    $region43: #{tpu_custom_call.1} parent=1 // pred_check_branch
      %130 = sbr.rel (0) target = $region45
    $region44: #{tpu_custom_call.1} parent=1 // pred_region
      %s132 = ssub.s32 256, 256
      %133 = vsyncadd [#allocation20], %s132
      %s134 = sshll.u32 [#allocation19], 4
      %s135 = int_to_ptr.vmem [resolvable:$true] %s134
      %140 = dma.hbm_to_vmem [thread:$0]  %s10, 256, %s135, [#allocation20], 128, 128, 8
    $region45: #{tpu_custom_call.1} parent=1 // pred_fallthru
      _
    // Predicated region
    $region46: #{tpu_custom_call.1} parent=1 // pred_check
      _
    $region47: #{tpu_custom_call.1} parent=1 // pred_check_branch
      %142 = sbr.rel (0) target = $region49
    $region48: #{tpu_custom_call.1} parent=1 // pred_region
      %143 = dma.done [#allocation5], 64
    $region49: #{tpu_custom_call.1} parent=1 // pred_fallthru
      _
    // Predicated region
    $region50: #{tpu_custom_call.1} parent=1 // pred_check
      _
    $region51: #{tpu_custom_call.1} parent=1 // pred_check_branch
      %145 = sbr.rel (0) target = $region53
    $region52: #{tpu_custom_call.1} parent=1 // pred_region
      %146 = dma.done [#allocation8], 256
    $region53: #{tpu_custom_call.1} parent=1 // pred_fallthru
      _
    // Predicated region
    $region54: #{tpu_custom_call.1} parent=1 // pred_check
      _
    $region55: #{tpu_custom_call.1} parent=1 // pred_check_branch
      %148 = sbr.rel (0) target = $region57
    $region56: #{tpu_custom_call.1} parent=1 // pred_region
      %149 = dma.done [#allocation8], 256
    $region57: #{tpu_custom_call.1} parent=1 // pred_fallthru
      _
    // Predicated region
    $region58: #{tpu_custom_call.1} parent=1 // pred_check
      _
    $region59: #{tpu_custom_call.1} parent=1 // pred_check_branch
      %151 = sbr.rel (0) target = $region61
    $region60: #{tpu_custom_call.1} parent=1 // pred_region
      %152 = dma.done [#allocation11], 16
    $region61: #{tpu_custom_call.1} parent=1 // pred_fallthru
      _
    // Predicated region
    $region62: #{tpu_custom_call.1} parent=1 // pred_check
      _
    $region63: #{tpu_custom_call.1} parent=1 // pred_check_branch
      %154 = sbr.rel (0) target = $region65
    $region64: #{tpu_custom_call.1} parent=1 // pred_region
      %155 = dma.done [#allocation11], 256
    $region65: #{tpu_custom_call.1} parent=1 // pred_fallthru
      _
    // Predicated region
    $region66: #{tpu_custom_call.1} parent=1 // pred_check
      _
    $region67: #{tpu_custom_call.1} parent=1 // pred_check_branch
      %157 = sbr.rel (0) target = $region69
    $region68: #{tpu_custom_call.1} parent=1 // pred_region
      %158 = dma.done [#allocation14], 256
    $region69: #{tpu_custom_call.1} parent=1 // pred_fallthru
      _
    // Predicated region
    $region70: #{tpu_custom_call.1} parent=1 // pred_check
      _
    $region71: #{tpu_custom_call.1} parent=1 // pred_check_branch
      %160 = sbr.rel (0) target = $region73
    $region72: #{tpu_custom_call.1} parent=1 // pred_region
      %161 = dma.done [#allocation14], 16
    $region73: #{tpu_custom_call.1} parent=1 // pred_fallthru
      _
    // Predicated region
    $region74: #{tpu_custom_call.1} parent=1 // pred_check
      _
    $region75: #{tpu_custom_call.1} parent=1 // pred_check_branch
      %163 = sbr.rel (0) target = $region77
    $region76: #{tpu_custom_call.1} parent=1 // pred_region
      %164 = dma.done [#allocation17], 256
    $region77: #{tpu_custom_call.1} parent=1 // pred_fallthru
      _
    // Predicated region
    $region78: #{tpu_custom_call.1} parent=1 // pred_check
      _
    $region79: #{tpu_custom_call.1} parent=1 // pred_check_branch
      %166 = sbr.rel (0) target = $region81
    $region80: #{tpu_custom_call.1} parent=1 // pred_region
      %167 = dma.done [#allocation17], 16
    $region81: #{tpu_custom_call.1} parent=1 // pred_fallthru
      _
    // Predicated region
    $region82: #{tpu_custom_call.1} parent=1 // pred_check
      _
    $region83: #{tpu_custom_call.1} parent=1 // pred_check_branch
      %169 = sbr.rel (0) target = $region85
    $region84: #{tpu_custom_call.1} parent=1 // pred_region
      %170 = dma.done [#allocation20], 256
    $region85: #{tpu_custom_call.1} parent=1 // pred_fallthru
      _
    %p172 = scmp.eq.s32.totalorder 0, 0
    // Predicated region
    $region86: #{tpu_custom_call.1} parent=1 // pred_check
      %p173 = pneg %p172
    $region87: #{tpu_custom_call.1} parent=1 // pred_check_branch
      %175 = sbr.rel (%p173) target = $region89
    $region88: #{tpu_custom_call.1} parent=1 // pred_region
      %v176 = vld [vmem:[%s9] sm:$0xff]
      %s177 = scalar_lea.vmem %s9, 8
      %v178 = vld [vmem:[%s177] sm:$0xff]
      %v179 = vld [vmem:[#allocation19] sm:$0xff]
      %s180 = scalar_lea.vmem [#allocation19], 8
      %v181 = vld [vmem:[%s180] sm:$0xff]
      %183 = vrot.lane.b32.xlu0 %v178, 32
      %v184 = vpop.permute.xlu0 %183
      %187 = vrot.lane.b32.xlu0 %v179, 64
      %v188 = vpop.permute.xlu0 %187
      %191 = vrot.lane.b32.xlu0 %v181, 96
      %v192 = vpop.permute.xlu0 %191
      %vm194 = vcmask 261120
      %v195 = vsel %vm194, %v176, %v184
      %vm196 = vcmask 523264
      %v197 = vsel %vm196, %v195, %v188
      %vm198 = vcmask 785408
      %v199 = vsel %vm198, %v197, %v192
      %200 = vst [vmem:[#allocation2] sm:$0xff] %v199
    $region89: #{tpu_custom_call.1} parent=1 // pred_fallthru
      _
    %v201 = vld [vmem:[#allocation2] sm:$0xff]
    %v202 = vld [vmem:[#allocation9] sm:$0xf]
    %v203 = vld [vmem:[#allocation9 + $0x4] sm:$0xf]
    %v204 = vld [vmem:[#allocation9 + $0x8] sm:$0xf]
    %v205 = vld [vmem:[#allocation9 + $0xc] sm:$0xf]
    %v206 = vld [vmem:[#allocation12] sm:$0xf]
    %v207 = vld [vmem:[#allocation12 + $0x4] sm:$0xf]
    %v208 = vld [vmem:[#allocation12 + $0x8] sm:$0xf]
    %v209 = vld [vmem:[#allocation12 + $0xc] sm:$0xf]
    %v210 = vld [vmem:[#allocation13] sm:$0xf]
    %v211 = vld [vmem:[#allocation13 + $0x4] sm:$0xf]
    %v212 = vld [vmem:[#allocation13 + $0x8] sm:$0xf]
    %v213 = vld [vmem:[#allocation13 + $0xc] sm:$0xf]
    %v214 = vld [vmem:[#allocation16] sm:$0xf]
    %v215 = vld [vmem:[#allocation16 + $0x4] sm:$0xf]
    %v216 = vld [vmem:[#allocation16 + $0x8] sm:$0xf]
    %v217 = vld [vmem:[#allocation16 + $0xc] sm:$0xf]
    %v218 = vld [vmem:[#allocation15] sm:$0x1]
    %v220 = vlaneseq
    %v221 = vshrl.u32 %v220, 7
    %v222 = vsub.s32 0, %v221
    %v223 = vrot.slane %v218, %v222
    %v225 = vld [vmem:[#allocation18] sm:$0x1]
    %v227 = vlaneseq
    %v228 = vshrl.u32 %v227, 7
    %v229 = vsub.s32 0, %v228
    %v230 = vrot.slane %v225, %v229
    %v232 = vlaneseq
    %v233 = vand.u32 %v232, 127
    %vm234 = vcmp.ge.s32.totalorder %v233, 64
    %vm235 = vcmp.lt.s32.totalorder %v233, 96
    %vm236 = vmand %vm234, %vm235
    %v237 = vld [vmem:[#allocation4] sm:$0xf]
    %v238 = vld [vmem:[#allocation7] sm:$0xf]
    %v239 = vld [vmem:[#allocation7 + $0x4] sm:$0xf]
    %v240 = vld [vmem:[#allocation7 + $0x8] sm:$0xf]
    %v241 = vld [vmem:[#allocation7 + $0xc] sm:$0xf]
    %v242 = vld [vmem:[#allocation10] sm:$0x1]
    %v244 = vlaneseq
    %v245 = vshrl.u32 %v244, 7
    %v246 = vsub.s32 0, %v245
    %v247 = vrot.slane %v242, %v246
    %v253 = vunpack.c.l.b16 %v238
    %v254 = vunpack.c.l.b16 %v239
    %v255 = vunpack.c.l.b16 %v240
    %v256 = vunpack.c.l.b16 %v241
    %v257 = vpack.c.b16 %v254, %v253
    %v258 = vpack.c.b16 %v256, %v255
    %vm261 = vcmask 261120
    %v263 = vsel %vm261, %v237, 0
    %265 = vmatprep.subr.bf16.mxu0 0
    %266 = vmatpush1.bf16.msra.mxu0 0
    %267 = vmatprep.subr.bf16.mxu0 0
    %268 = vmatpush1.bf16.msra.mxu0 0
    %269 = vmatprep.subr.bf16.mxu0 0
    %270 = vmatpush1.bf16.msra.mxu0 0
    %271 = vmatprep.subr.bf16.mxu0 0
    %272 = vmatpush1.bf16.msra.mxu0 0
    %273 = vmatprep.subr.bf16.mxu0 0
    %274 = vmatpush1.bf16.msra.mxu0 0
    %275 = vmatprep.subr.bf16.mxu0 0
    %276 = vmatpush1.bf16.msra.mxu0 0
    %277 = vmatprep.subr.bf16.mxu0 0
    %278 = vmatpush1.bf16.msra.mxu0 %v258
    %279 = vmatprep.subr.bf16.mxu0 0
    %280 = vmatpush1.bf16.msra.mxu0 %v257
    %281 = vmatprep.subr.bf16.mxu0 0
    %282 = vmatpush2.bf16.msra.mxu0 0
    %283 = vmatprep.subr.bf16.mxu0 0
    %284 = vmatpush2.bf16.msra.mxu0 0
    %285 = vmatprep.subr.bf16.mxu0 0
    %286 = vmatpush2.bf16.msra.mxu0 0
    %287 = vmatprep.subr.bf16.mxu0 0
    %288 = vmatpush2.bf16.msra.mxu0 0
    %289 = vmatprep.subr.bf16.mxu0 0
    %290 = vmatpush2.bf16.msra.mxu0 0
    %291 = vmatprep.subr.bf16.mxu0 0
    %292 = vmatpush2.bf16.msra.mxu0 0
    %293 = vmatprep.subr.bf16.mxu0 0
    %294 = vmatpush2.bf16.msra.mxu0 0
    %295 = vmatprep.subr.bf16.mxu0 0
    %296 = vmatpush2.bf16.msra.mxu0 0
    %297 = vmatprep.mubr.bf16.mxu0 0
    %298 = vmatmul.mubr.bf16.gmra.mxu0 %v263
    %v299 = vpop.f32.mrf.mxu0
    %v300 = vadd.f32 %v247, %v299
    %v301 = vpop.f32.mrf.mxu0
    %v302 = vpop.f32.mrf.mxu0
    %v303 = vpop.f32.mrf.mxu0
    %304 = vdwg.mxu0
    %305 = vst [vmem:[#allocation3] sm:$0xff] %v300
    %v306 = vld [vmem:[#allocation3] sm:$0xff]
    %v307 = vpack.c.bf16 %v201, %v201
    %v312 = vunpack.c.l.b16 %v202
    %v313 = vunpack.c.l.b16 %v203
    %v314 = vunpack.c.l.b16 %v204
    %v315 = vunpack.c.l.b16 %v205
    %v316 = vpack.c.b16 %v313, %v312
    %v317 = vpack.c.b16 %v315, %v314
    %v321 = vsel %vm261, %v307, 0
    %323 = vmatprep.subr.bf16.mxu0 0
    %324 = vmatpush1.bf16.msra.mxu0 0
    %325 = vmatprep.subr.bf16.mxu0 0
    %326 = vmatpush1.bf16.msra.mxu0 0
    %327 = vmatprep.subr.bf16.mxu0 0
    %328 = vmatpush1.bf16.msra.mxu0 0
    %329 = vmatprep.subr.bf16.mxu0 0
    %330 = vmatpush1.bf16.msra.mxu0 0
    %331 = vmatprep.subr.bf16.mxu0 0
    %332 = vmatpush1.bf16.msra.mxu0 0
    %333 = vmatprep.subr.bf16.mxu0 0
    %334 = vmatpush1.bf16.msra.mxu0 0
    %335 = vmatprep.subr.bf16.mxu0 0
    %336 = vmatpush1.bf16.msra.mxu0 %v317
    %337 = vmatprep.subr.bf16.mxu0 0
    %338 = vmatpush1.bf16.msra.mxu0 %v316
    %339 = vmatprep.subr.bf16.mxu0 0
    %340 = vmatpush2.bf16.msra.mxu0 0
    %341 = vmatprep.subr.bf16.mxu0 0
    %342 = vmatpush2.bf16.msra.mxu0 0
    %343 = vmatprep.subr.bf16.mxu0 0
    %344 = vmatpush2.bf16.msra.mxu0 0
    %345 = vmatprep.subr.bf16.mxu0 0
    %346 = vmatpush2.bf16.msra.mxu0 0
    %347 = vmatprep.subr.bf16.mxu0 0
    %348 = vmatpush2.bf16.msra.mxu0 0
    %349 = vmatprep.subr.bf16.mxu0 0
    %350 = vmatpush2.bf16.msra.mxu0 0
    %351 = vmatprep.subr.bf16.mxu0 0
    %352 = vmatpush2.bf16.msra.mxu0 0
    %353 = vmatprep.subr.bf16.mxu0 0
    %354 = vmatpush2.bf16.msra.mxu0 0
    %355 = vmatprep.mubr.bf16.mxu0 0
    %356 = vmatmul.mubr.bf16.gmra.mxu0 %v321
    %v357 = vpop.f32.mrf.mxu0
    %v358 = vadd.f32 0.0, %v357
    %v359 = vpop.f32.mrf.mxu0
    %v360 = vpop.f32.mrf.mxu0
    %v361 = vpop.f32.mrf.mxu0
    %362 = vdwg.mxu0
    %v363 = vadd.f32 %v306, %v358
    %v364 = vxor.u32 %v363, 2147483648
    %v365 = vmul.f32 %v364, 1.442695
    %v366 = vpow.pop %v365
    %v367 = vadd.f32 %v366, 1.0
    %v368 = vrcp.pop %v367
    %v369 = vmul.f32 1.0, %v368
    %v370 = vtanh.pop %v363
    %v371 = vsel %vm236, %v370, %v369
    %373 = vrot.lane.b32.xlu0 %v201, 96
    %v374 = vpop.permute.xlu0 %373
    %v376 = vmul.f32 %v371, %v374
    %378 = vrot.lane.b32.xlu0 %v371, 64
    %v379 = vpop.permute.xlu0 %378
    %v381 = vmul.f32 %v371, %v379
    %383 = vrot.lane.b32.xlu0 %v381, 32
    %v384 = vpop.permute.xlu0 %383
    %v386 = vadd.f32 %v376, %v384
    %v387 = vtanh.pop %v386
    %389 = vrot.lane.b32.xlu0 %v387, 64
    %v390 = vpop.permute.xlu0 %389
    %v392 = vmul.f32 %v371, %v390
    %v393 = vpack.c.bf16 %v392, %v392
    %395 = vrot.lane.b32.xlu0 %v307, 96
    %v396 = vpop.permute.xlu0 %395
    %v401 = vunpack.c.l.b16 %v210
    %v402 = vunpack.c.l.b16 %v211
    %v403 = vunpack.c.l.b16 %v212
    %v404 = vunpack.c.l.b16 %v213
    %v405 = vpack.c.b16 %v402, %v401
    %v406 = vpack.c.b16 %v404, %v403
    %v410 = vsel %vm261, %v396, 0
    %412 = vmatprep.subr.bf16.mxu0 0
    %413 = vmatpush1.bf16.msra.mxu0 0
    %414 = vmatprep.subr.bf16.mxu0 0
    %415 = vmatpush1.bf16.msra.mxu0 0
    %416 = vmatprep.subr.bf16.mxu0 0
    %417 = vmatpush1.bf16.msra.mxu0 0
    %418 = vmatprep.subr.bf16.mxu0 0
    %419 = vmatpush1.bf16.msra.mxu0 0
    %420 = vmatprep.subr.bf16.mxu0 0
    %421 = vmatpush1.bf16.msra.mxu0 0
    %422 = vmatprep.subr.bf16.mxu0 0
    %423 = vmatpush1.bf16.msra.mxu0 0
    %424 = vmatprep.subr.bf16.mxu0 0
    %425 = vmatpush1.bf16.msra.mxu0 %v406
    %426 = vmatprep.subr.bf16.mxu0 0
    %427 = vmatpush1.bf16.msra.mxu0 %v405
    %428 = vmatprep.subr.bf16.mxu0 0
    %429 = vmatpush2.bf16.msra.mxu0 0
    %430 = vmatprep.subr.bf16.mxu0 0
    %431 = vmatpush2.bf16.msra.mxu0 0
    %432 = vmatprep.subr.bf16.mxu0 0
    %433 = vmatpush2.bf16.msra.mxu0 0
    %434 = vmatprep.subr.bf16.mxu0 0
    %435 = vmatpush2.bf16.msra.mxu0 0
    %436 = vmatprep.subr.bf16.mxu0 0
    %437 = vmatpush2.bf16.msra.mxu0 0
    %438 = vmatprep.subr.bf16.mxu0 0
    %439 = vmatpush2.bf16.msra.mxu0 0
    %440 = vmatprep.subr.bf16.mxu0 0
    %441 = vmatpush2.bf16.msra.mxu0 0
    %442 = vmatprep.subr.bf16.mxu0 0
    %443 = vmatpush2.bf16.msra.mxu0 0
    %444 = vmatprep.mubr.bf16.mxu0 0
    %445 = vmatmul.mubr.bf16.gmra.mxu0 %v410
    %v446 = vpop.f32.mrf.mxu0
    %v447 = vadd.f32 0.0, %v446
    %v448 = vpop.f32.mrf.mxu0
    %v449 = vpop.f32.mrf.mxu0
    %v450 = vpop.f32.mrf.mxu0
    %451 = vdwg.mxu0
    %453 = vrot.lane.b32.xlu0 %v393, 32
    %v454 = vpop.permute.xlu0 %453
    %v459 = vunpack.c.l.b16 %v206
    %v460 = vunpack.c.l.b16 %v207
    %v461 = vunpack.c.l.b16 %v208
    %v462 = vunpack.c.l.b16 %v209
    %v463 = vpack.c.b16 %v460, %v459
    %v464 = vpack.c.b16 %v462, %v461
    %v468 = vsel %vm261, %v454, 0
    %470 = vmatprep.subr.bf16.mxu0 0
    %471 = vmatpush1.bf16.msra.mxu0 0
    %472 = vmatprep.subr.bf16.mxu0 0
    %473 = vmatpush1.bf16.msra.mxu0 0
    %474 = vmatprep.subr.bf16.mxu0 0
    %475 = vmatpush1.bf16.msra.mxu0 0
    %476 = vmatprep.subr.bf16.mxu0 0
    %477 = vmatpush1.bf16.msra.mxu0 0
    %478 = vmatprep.subr.bf16.mxu0 0
    %479 = vmatpush1.bf16.msra.mxu0 0
    %480 = vmatprep.subr.bf16.mxu0 0
    %481 = vmatpush1.bf16.msra.mxu0 0
    %482 = vmatprep.subr.bf16.mxu0 0
    %483 = vmatpush1.bf16.msra.mxu0 %v464
    %484 = vmatprep.subr.bf16.mxu0 0
    %485 = vmatpush1.bf16.msra.mxu0 %v463
    %486 = vmatprep.subr.bf16.mxu0 0
    %487 = vmatpush2.bf16.msra.mxu0 0
    %488 = vmatprep.subr.bf16.mxu0 0
    %489 = vmatpush2.bf16.msra.mxu0 0
    %490 = vmatprep.subr.bf16.mxu0 0
    %491 = vmatpush2.bf16.msra.mxu0 0
    %492 = vmatprep.subr.bf16.mxu0 0
    %493 = vmatpush2.bf16.msra.mxu0 0
    %494 = vmatprep.subr.bf16.mxu0 0
    %495 = vmatpush2.bf16.msra.mxu0 0
    %496 = vmatprep.subr.bf16.mxu0 0
    %497 = vmatpush2.bf16.msra.mxu0 0
    %498 = vmatprep.subr.bf16.mxu0 0
    %499 = vmatpush2.bf16.msra.mxu0 0
    %500 = vmatprep.subr.bf16.mxu0 0
    %501 = vmatpush2.bf16.msra.mxu0 0
    %502 = vmatprep.mubr.bf16.mxu0 0
    %503 = vmatmul.mubr.bf16.gmra.mxu0 %v468
    %v504 = vpop.f32.mrf.mxu0
    %v505 = vadd.f32 %v447, %v504
    %v506 = vpop.f32.mrf.mxu0
    %v507 = vpop.f32.mrf.mxu0
    %v508 = vpop.f32.mrf.mxu0
    %509 = vdwg.mxu0
    %v510 = vadd.f32 %v505, %v223
    %v511 = vxor.u32 %v510, 2147483648
    %v512 = vmul.f32 %v511, 1.442695
    %v513 = vpow.pop %v512
    %v514 = vadd.f32 %v513, 1.0
    %v515 = vrcp.pop %v514
    %v516 = vmul.f32 1.0, %v515
    %v517 = vtanh.pop %v510
    %v518 = vsel %vm236, %v517, %v516
    %519 = vrot.lane.b32.xlu0 %v201, 64
    %v520 = vpop.permute.xlu0 %519
    %v522 = vmul.f32 %v518, %v520
    %524 = vrot.lane.b32.xlu0 %v518, 64
    %v525 = vpop.permute.xlu0 %524
    %v527 = vmul.f32 %v518, %v525
    %529 = vrot.lane.b32.xlu0 %v527, 32
    %v530 = vpop.permute.xlu0 %529
    %v532 = vadd.f32 %v522, %v530
    %v533 = vtanh.pop %v532
    %535 = vrot.lane.b32.xlu0 %v533, 64
    %v536 = vpop.permute.xlu0 %535
    %v538 = vmul.f32 %v518, %v536
    %v539 = vpack.c.bf16 %v538, %v538
    %541 = vrot.lane.b32.xlu0 %v539, 32
    %v542 = vpop.permute.xlu0 %541
    %v547 = vunpack.c.l.b16 %v214
    %v548 = vunpack.c.l.b16 %v215
    %v549 = vunpack.c.l.b16 %v216
    %v550 = vunpack.c.l.b16 %v217
    %v551 = vpack.c.b16 %v548, %v547
    %v552 = vpack.c.b16 %v550, %v549
    %v556 = vsel %vm261, %v542, 0
    %558 = vmatprep.subr.bf16.mxu0 0
    %559 = vmatpush1.bf16.msra.mxu0 0
    %560 = vmatprep.subr.bf16.mxu0 0
    %561 = vmatpush1.bf16.msra.mxu0 0
    %562 = vmatprep.subr.bf16.mxu0 0
    %563 = vmatpush1.bf16.msra.mxu0 0
    %564 = vmatprep.subr.bf16.mxu0 0
    %565 = vmatpush1.bf16.msra.mxu0 0
    %566 = vmatprep.subr.bf16.mxu0 0
    %567 = vmatpush1.bf16.msra.mxu0 0
    %568 = vmatprep.subr.bf16.mxu0 0
    %569 = vmatpush1.bf16.msra.mxu0 0
    %570 = vmatprep.subr.bf16.mxu0 0
    %571 = vmatpush1.bf16.msra.mxu0 %v552
    %572 = vmatprep.subr.bf16.mxu0 0
    %573 = vmatpush1.bf16.msra.mxu0 %v551
    %574 = vmatprep.subr.bf16.mxu0 0
    %575 = vmatpush2.bf16.msra.mxu0 0
    %576 = vmatprep.subr.bf16.mxu0 0
    %577 = vmatpush2.bf16.msra.mxu0 0
    %578 = vmatprep.subr.bf16.mxu0 0
    %579 = vmatpush2.bf16.msra.mxu0 0
    %580 = vmatprep.subr.bf16.mxu0 0
    %581 = vmatpush2.bf16.msra.mxu0 0
    %582 = vmatprep.subr.bf16.mxu0 0
    %583 = vmatpush2.bf16.msra.mxu0 0
    %584 = vmatprep.subr.bf16.mxu0 0
    %585 = vmatpush2.bf16.msra.mxu0 0
    %586 = vmatprep.subr.bf16.mxu0 0
    %587 = vmatpush2.bf16.msra.mxu0 0
    %588 = vmatprep.subr.bf16.mxu0 0
    %589 = vmatpush2.bf16.msra.mxu0 0
    %590 = vmatprep.mubr.bf16.mxu0 0
    %591 = vmatmul.mubr.bf16.gmra.mxu0 %v556
    %v592 = vpop.f32.mrf.mxu0
    %v593 = vadd.f32 %v230, %v592
    %v594 = vpop.f32.mrf.mxu0
    %v595 = vpop.f32.mrf.mxu0
    %v596 = vpop.f32.mrf.mxu0
    %597 = vdwg.mxu0
    %598 = vst [vmem:[#allocation21] sm:$0xff] %v593
    %600 = vrot.lane.b32.xlu0 %v392, 32
    %v601 = vpop.permute.xlu0 %600
    %604 = vrot.lane.b32.xlu0 %v538, 64
    %v605 = vpop.permute.xlu0 %604
    %608 = vrot.lane.b32.xlu0 %v386, 32
    %v609 = vpop.permute.xlu0 %608
    %612 = vrot.lane.b32.xlu0 %v532, 64
    %v613 = vpop.permute.xlu0 %612
    %v615 = vsel %vm261, %v601, %v605
    %vm616 = vcmask 523264
    %v617 = vsel %vm616, %v615, %v609
    %vm618 = vcmask 785408
    %v619 = vsel %vm618, %v617, %v613
    %620 = vst [vmem:[#allocation2] sm:$0xff] %v619
    // Predicated region
    $region90: #{tpu_custom_call.1} parent=1 // pred_check
      %p621 = pneg %p172
    $region91: #{tpu_custom_call.1} parent=1 // pred_check_branch
      %623 = sbr.rel (%p621) target = $region93
    $region92: #{tpu_custom_call.1} parent=1 // pred_region
      %624 = vst.msk [vmem:[#allocation22] sm:$0xff] %vm261, %v601
      %625 = vrot.lane.b32.xlu0 %v538, 32
      %v626 = vpop.permute.xlu0 %625
      %s628 = scalar_lea.vmem [#allocation22], 8
      %629 = vst.msk [vmem:[%s628] sm:$0xff] %vm261, %v626
      %630 = vrot.lane.b32.xlu0 %v386, 96
      %v631 = vpop.permute.xlu0 %630
      %633 = vst.msk [vmem:[#allocation24] sm:$0xff] %vm261, %v631
      %634 = vrot.lane.b32.xlu0 %v532, 96
      %v635 = vpop.permute.xlu0 %634
      %s637 = scalar_lea.vmem [#allocation24], 8
      %638 = vst.msk [vmem:[%s637] sm:$0xff] %vm261, %v635
    $region93: #{tpu_custom_call.1} parent=1 // pred_fallthru
      _
    // Predicated region
    $region94: #{tpu_custom_call.1} parent=1 // pred_check
      _
    $region95: #{tpu_custom_call.1} parent=1 // pred_check_branch
      %640 = sbr.rel (0) target = $region97
    $region96: #{tpu_custom_call.1} parent=1 // pred_region
      %s642 = ssub.s32 128, 128
      %643 = vsyncadd [#allocation6], %s642
      %s645 = sshll.u32 [#allocation21], 4
      %s646 = int_to_ptr.vmem [resolvable:$true] %s645
      %648 = dma.vmem_to_hbm [thread:$0]  %s646, 128, %s11, [#allocation6]
    $region97: #{tpu_custom_call.1} parent=1 // pred_fallthru
      _
    // Predicated region
    $region98: #{tpu_custom_call.1} parent=1 // pred_check
      _
    $region99: #{tpu_custom_call.1} parent=1 // pred_check_branch
      %650 = sbr.rel (0) target = $region101
    $region100: #{tpu_custom_call.1} parent=1 // pred_region
      %s652 = ssub.s32 256, 256
      %653 = vsyncadd [#allocation23], %s652
      %s654 = sshll.u32 [#allocation22], 4
      %s655 = int_to_ptr.vmem [resolvable:$true] %s654
      %660 = dma.vmem_to_hbm [thread:$0]  %s655, 256, %s12, [#allocation23], 128, 128, 8
    $region101: #{tpu_custom_call.1} parent=1 // pred_fallthru
      _
    // Predicated region
    $region102: #{tpu_custom_call.1} parent=1 // pred_check
      _
    $region103: #{tpu_custom_call.1} parent=1 // pred_check_branch
      %662 = sbr.rel (0) target = $region105
    $region104: #{tpu_custom_call.1} parent=1 // pred_region
      %s664 = ssub.s32 256, 256
      %665 = vsyncadd [#allocation23], %s664
      %s666 = sshll.u32 [#allocation24], 4
      %s667 = int_to_ptr.vmem [resolvable:$true] %s666
      %672 = dma.vmem_to_hbm [thread:$0]  %s667, 256, %s13, [#allocation23], 128, 128, 8
    $region105: #{tpu_custom_call.1} parent=1 // pred_fallthru
      _
    // Predicated region
    $region106: #{tpu_custom_call.1} parent=1 // pred_check
      _
    $region107: #{tpu_custom_call.1} parent=1 // pred_check_branch
      %674 = sbr.rel (0) target = $region109
    $region108: #{tpu_custom_call.1} parent=1 // pred_region
      %675 = dma.done [#allocation6], 128
    $region109: #{tpu_custom_call.1} parent=1 // pred_fallthru
      _
    // Predicated region
    $region110: #{tpu_custom_call.1} parent=1 // pred_check
      _
    $region111: #{tpu_custom_call.1} parent=1 // pred_check_branch
      %677 = sbr.rel (0) target = $region113
    $region112: #{tpu_custom_call.1} parent=1 // pred_region
      %678 = dma.done [#allocation23], 256
    $region113: #{tpu_custom_call.1} parent=1 // pred_fallthru
      _
    // Predicated region
    $region114: #{tpu_custom_call.1} parent=1 // pred_check
      _
    $region115: #{tpu_custom_call.1} parent=1 // pred_check_branch
      %680 = sbr.rel (0) target = $region117
    $region116: #{tpu_custom_call.1} parent=1 // pred_region
      %681 = dma.done [#allocation23], 256
    $region117: #{tpu_custom_call.1} parent=1 // pred_fallthru
      _
    %682 = vsyncpa [#allocation5], 1
    %683 = vsyncpa [#allocation8], 1
    %684 = vsyncpa [#allocation11], 1
    %685 = vsyncpa [#allocation14], 1
    %686 = vsyncpa [#allocation17], 1
    %687 = vsyncpa [#allocation20], 1
    %688 = vsyncpa [#allocation6], 1
    %689 = vsyncpa [#allocation23], 1

</llo_original>
